<compile_context>
chip_gen: v5e
topology: v5e:2x2
jax: 0.10.0
libtpu: 0.0.40
codegen_flags: <defaults>
</compile_context>

<pallas_src>
import jax
import jax.numpy as jnp
from jax.experimental import pallas as pl
from jax.experimental.pallas import tpu as pltpu

NUM_CLASSES = 6
IN_DIM = 120 * 6      # 720
H1 = 128              # encoder hidden
H2_ENC = 64           # encoder output (fused away with the next linear)
H2 = 32               # classifier hidden
LANE = 128            # TPU lane width; class axis is padded to this for lane-dense stores


def _round_up(v, m):
    return ((v + m - 1) // m) * m


def _classifier_kernel(x_ref, w1_ref, w23_ref, w4_ref, b_ref, probs_ref, logits_ref):
    # b_ref: (3, 128) f32 packed biases: row0 = b1, row1[:32] = b23, row2 = b4 (pad = -1e30)
    bias = b_ref[...]
    x = x_ref[...]                                   # (TM, 720) bf16

    # Linear(720, 128) + ReLU          (bf16 MXU operands, f32 accumulation)
    h = jnp.dot(x, w1_ref[...], preferred_element_type=jnp.float32) + bias[0:1, :]
    h = jnp.maximum(h, 0.0).astype(jnp.bfloat16)     # (TM, 128)

    # Fused Linear(128,64)·Linear(64,32)  (no activation between them in the model) + ReLU
    h = jnp.dot(h, w23_ref[...], preferred_element_type=jnp.float32) + bias[1:2, :H2]
    h = jnp.maximum(h, 0.0).astype(jnp.bfloat16)     # (TM, 32)

    # Linear(32, 6) with the class axis zero-padded to 128 lanes; padded bias = -1e30
    logits = jnp.dot(h, w4_ref[...], preferred_element_type=jnp.float32) + bias[2:3, :]

    # numerically stable softmax over the (padded) class axis; padded lanes underflow to 0
    m = jnp.max(logits, axis=1, keepdims=True)
    e = jnp.exp(logits - m)
    denom = jnp.sum(e, axis=1, keepdims=True)
    probs = e * pl.reciprocal(denom, approx=True)

    probs_ref[...] = probs                           # lane-dense (TM, 128) f32 stores
    logits_ref[...] = logits


def _prepare_params(params):
    """Fold the 4 Linears into 3 bf16 matmuls + one packed f32 bias block."""
    w1, b1, w2, b2, w3, b3, w4, b4 = params
    f32 = jnp.float32

    # Algebraic fusion of the two back-to-back linears (no activation between them).
    w23 = jnp.dot(w2, w3, preferred_element_type=f32)          # (128, 32)
    b23 = jnp.dot(b2, w3, preferred_element_type=f32) + b3     # (1, 32)

    # Pad the final linear's output dim (6) to 128 lanes.
    w4p = jnp.zeros((H2, LANE), f32).at[:, :NUM_CLASSES].set(w4)

    bias = jnp.zeros((3, LANE), f32)
    bias = bias.at[0, :H1].set(b1[0])
    bias = bias.at[1, :H2].set(b23[0])
    bias = bias.at[2, :].set(-1e30)                  # padded logits -> exp() == 0
    bias = bias.at[2, :NUM_CLASSES].set(b4[0])

    return (w1.astype(jnp.bfloat16),
            w23.astype(jnp.bfloat16),
            w4p.astype(jnp.bfloat16),
            bias)


def classifier_forward(x, params, *, tile_m=512):
    """x: [B, 720] float32.  Returns (probs [B, 6], logits [B, 6]) in float32."""
    B = x.shape[0]
    w1, w23, w4p, bias = _prepare_params(params)

    # Batch tiling: TM rows per grid step (multiple of 8 for sublane alignment).
    TM = min(tile_m, _round_up(B, 8))
    B_pad = _round_up(B, TM)
    if B_pad != B:
        x = jnp.pad(x, ((0, B_pad - B), (0, 0)))
    x = x.astype(jnp.bfloat16)

    grid = (B_pad // TM,)

    flops = 2 * B_pad * (IN_DIM * H1 + H1 * H2 + H2 * LANE)
    bytes_accessed = (B_pad * IN_DIM * 2                      # bf16 activations in
                      + 2 * B_pad * LANE * 4                  # two lane-padded f32 outputs
                      + (IN_DIM * H1 + H1 * H2 + H2 * LANE) * 2
                      + 3 * LANE * 4)
    cost = pl.CostEstimate(flops=flops,
                           transcendentals=B_pad * LANE,
                           bytes_accessed=bytes_accessed)

    probs_pad, logits_pad = pl.pallas_call(
        _classifier_kernel,
        grid=grid,
        in_specs=[
            pl.BlockSpec((TM, IN_DIM), lambda i: (i, 0)),     # activations: tiled over batch
            pl.BlockSpec((IN_DIM, H1), lambda i: (0, 0)),     # weights: VMEM-resident
            pl.BlockSpec((H1, H2), lambda i: (0, 0)),
            pl.BlockSpec((H2, LANE), lambda i: (0, 0)),
            pl.BlockSpec((3, LANE), lambda i: (0, 0)),        # packed biases
        ],
        out_specs=(
            pl.BlockSpec((TM, LANE), lambda i: (i, 0)),
            pl.BlockSpec((TM, LANE), lambda i: (i, 0)),
        ),
        out_shape=(
            jax.ShapeDtypeStruct((B_pad, LANE), jnp.float32),
            jax.ShapeDtypeStruct((B_pad, LANE), jnp.float32),
        ),
        compiler_params=pltpu.CompilerParams(
            dimension_semantics=("parallel",),                # megacore sharding on v7x
            vmem_limit_bytes=32 << 20,
        ),
        cost_estimate=cost,
    )(x, w1, w23, w4p, bias)

    # Strip batch padding and the 128-lane class padding.
    return probs_pad[:B, :NUM_CLASSES], logits_pad[:B, :NUM_CLASSES]


def init_params(key):
    """Deterministic PyTorch-style (Kaiming-uniform-ish) init for all Linears."""
    def linear(key, fan_in, fan_out):
        kw, kb = jax.random.split(key)
        bound = 1.0 / jnp.sqrt(fan_in)
        # weights stored as [in, out] so the math is x @ W
        w = jax.random.uniform(kw, (fan_in, fan_out), jnp.float32, -bound, bound)
        b = jax.random.uniform(kb, (1, fan_out), jnp.float32, -bound, bound)
        return w, b

    k1, k2, k3, k4 = jax.random.split(key, 4)
    w1, b1 = linear(k1, IN_DIM, H1)
    w2, b2 = linear(k2, H1, H2_ENC)
    w3, b3 = linear(k3, H2_ENC, H2)
    w4, b4 = linear(k4, H2, NUM_CLASSES)
    return (w1, b1, w2, b2, w3, b3, w4, b4)


def reference_forward(x, params):
    """Pure-JAX f32 reference matching the PyTorch module (unfused, unpadded)."""
    w1, b1, w2, b2, w3, b3, w4, b4 = params
    h = jnp.maximum(x @ w1 + b1, 0.0)
    h = h @ w2 + b2                       # encoder ends without an activation
    h = jnp.maximum(h @ w3 + b3, 0.0)
    logits = h @ w4 + b4
    return jax.nn.softmax(logits, axis=1), logits


if __name__ == "__main__":
    key = jax.random.PRNGKey(0)
    kx, kp = jax.random.split(key)

    B = 10  # deliberately not a multiple of 8 to exercise the pad/slice path
    x = jax.random.normal(kx, (B, IN_DIM), dtype=jnp.float32)
    params = init_params(kp)

    probs, logits = classifier_forward(x, params)
    jax.block_until_ready((probs, logits))

    # sanity check against the pure-JAX f32 reference (bf16 operands -> loose tolerances)
    ref_probs, ref_logits = reference_forward(x, params)
    assert probs.shape == (B, NUM_CLASSES) and logits.shape == (B, NUM_CLASSES)
    assert jnp.allclose(logits, ref_logits, atol=5e-2, rtol=5e-2)
    assert jnp.allclose(probs, ref_probs, atol=2e-2, rtol=5e-2)
    assert jnp.allclose(jnp.sum(probs, axis=1), 1.0, atol=5e-3)

    print("KERNEL_OK")
</pallas_src>

<mosaic_0001>
module attributes {stable_mosaic.version = 11 : i64} {
  func.func @_classifier_kernel(%arg0: i32, %arg1: memref<16x720xbf16, #tpu.memory_space<vmem>>, %arg2: memref<720x128xbf16, #tpu.memory_space<vmem>>, %arg3: memref<128x32xbf16, #tpu.memory_space<vmem>>, %arg4: memref<32x128xbf16, #tpu.memory_space<vmem>>, %arg5: memref<3x128xf32, #tpu.memory_space<vmem>>, %arg6: memref<16x128xf32, #tpu.memory_space<vmem>>, %arg7: memref<16x128xf32, #tpu.memory_space<vmem>>) attributes {dimension_semantics = [#tpu.dimension_semantics<parallel>], iteration_bounds = array<i64: 1>, scalar_prefetch = 0 : i64, scratch_operands = 0 : i64, tpu.core_type = #tpu.core_type<tc>, window_params = [{transform_indices = @transform_0, window_bounds = array<i64: 16, 720>}, {pipeline_mode = #tpu.pipeline_mode<synchronous>, transform_indices = @transform_1, window_bounds = array<i64: 720, 128>}, {pipeline_mode = #tpu.pipeline_mode<synchronous>, transform_indices = @transform_2, window_bounds = array<i64: 128, 32>}, {pipeline_mode = #tpu.pipeline_mode<synchronous>, transform_indices = @transform_3, window_bounds = array<i64: 32, 128>}, {pipeline_mode = #tpu.pipeline_mode<synchronous>, transform_indices = @transform_4, window_bounds = array<i64: 3, 128>}, {transform_indices = @transform_5, window_bounds = array<i64: 16, 128>}, {transform_indices = @transform_6, window_bounds = array<i64: 16, 128>}]} {
    %c0 = arith.constant 0 : index
    %c0_0 = arith.constant 0 : index
    %0 = vector.load %arg5[%c0, %c0_0] : memref<3x128xf32, #tpu.memory_space<vmem>>, vector<3x128xf32>
    %c0_1 = arith.constant 0 : index
    %c0_2 = arith.constant 0 : index
    %1 = vector.load %arg1[%c0_1, %c0_2] : memref<16x720xbf16, #tpu.memory_space<vmem>>, vector<16x720xbf16>
    %c0_3 = arith.constant 0 : index
    %c0_4 = arith.constant 0 : index
    %2 = vector.load %arg2[%c0_3, %c0_4] : memref<720x128xbf16, #tpu.memory_space<vmem>>, vector<720x128xbf16>
    %cst = arith.constant dense<0.000000e+00> : vector<16x128xf32>
    %3 = tpu.matmul %1, %2, %cst {dimension_numbers = #tpu.dot_dimension_numbers<[1], [0], [0], [1], [0, 0, 1, 1], [], []>} : vector<16x720xbf16>, vector<720x128xbf16>, vector<16x128xf32> -> vector<16x128xf32>
    %4 = vector.extract_strided_slice %0 {offsets = [0, 0], sizes = [1, 128], strides = [1, 1]} : vector<3x128xf32> to vector<1x128xf32>
    %5 = vector.broadcast %4 : vector<1x128xf32> to vector<16x128xf32>
    %6 = arith.addf %3, %5 : vector<16x128xf32>
    %cst_5 = arith.constant 0.000000e+00 : f32
    %7 = vector.broadcast %cst_5 : f32 to vector<16x128xf32>
    %8 = arith.maximumf %6, %7 : vector<16x128xf32>
    %9 = arith.truncf %8 : vector<16x128xf32> to vector<16x128xbf16>
    %c0_6 = arith.constant 0 : index
    %c0_7 = arith.constant 0 : index
    %10 = vector.load %arg3[%c0_6, %c0_7] : memref<128x32xbf16, #tpu.memory_space<vmem>>, vector<128x32xbf16>
    %cst_8 = arith.constant dense<0.000000e+00> : vector<16x32xf32>
    %11 = tpu.matmul %9, %10, %cst_8 {dimension_numbers = #tpu.dot_dimension_numbers<[1], [0], [0], [1], [0, 0, 1, 1], [], []>} : vector<16x128xbf16>, vector<128x32xbf16>, vector<16x32xf32> -> vector<16x32xf32>
    %12 = vector.extract_strided_slice %0 {offsets = [1, 0], sizes = [1, 32], strides = [1, 1]} : vector<3x128xf32> to vector<1x32xf32>
    %13 = vector.broadcast %12 : vector<1x32xf32> to vector<16x32xf32>
    %14 = arith.addf %11, %13 : vector<16x32xf32>
    %cst_9 = arith.constant 0.000000e+00 : f32
    %15 = vector.broadcast %cst_9 : f32 to vector<16x32xf32>
    %16 = arith.maximumf %14, %15 : vector<16x32xf32>
    %17 = arith.truncf %16 : vector<16x32xf32> to vector<16x32xbf16>
    %c0_10 = arith.constant 0 : index
    %c0_11 = arith.constant 0 : index
    %18 = vector.load %arg4[%c0_10, %c0_11] : memref<32x128xbf16, #tpu.memory_space<vmem>>, vector<32x128xbf16>
    %cst_12 = arith.constant dense<0.000000e+00> : vector<16x128xf32>
    %19 = tpu.matmul %17, %18, %cst_12 {dimension_numbers = #tpu.dot_dimension_numbers<[1], [0], [0], [1], [0, 0, 1, 1], [], []>} : vector<16x32xbf16>, vector<32x128xbf16>, vector<16x128xf32> -> vector<16x128xf32>
    %20 = vector.extract_strided_slice %0 {offsets = [2, 0], sizes = [1, 128], strides = [1, 1]} : vector<3x128xf32> to vector<1x128xf32>
    %21 = vector.broadcast %20 : vector<1x128xf32> to vector<16x128xf32>
    %22 = arith.addf %19, %21 : vector<16x128xf32>
    %cst_13 = arith.constant dense<0xFF800000> : vector<16xf32>
    %23 = vector.multi_reduction <maximumf>, %22, %cst_13 [1] : vector<16x128xf32> to vector<16xf32>
    %24 = vector.shape_cast %23 : vector<16xf32> to vector<16x1xf32>
    %25 = vector.broadcast %24 : vector<16x1xf32> to vector<16x128xf32>
    %26 = arith.subf %22, %25 : vector<16x128xf32>
    %27 = math.exp %26 : vector<16x128xf32>
    %cst_14 = arith.constant dense<0.000000e+00> : vector<16xf32>
    %28 = vector.multi_reduction <add>, %27, %cst_14 [1] : vector<16x128xf32> to vector<16xf32>
    %29 = vector.shape_cast %28 : vector<16xf32> to vector<16x1xf32>
    %30 = tpu.reciprocal %29 {approx = true} : vector<16x1xf32> -> vector<16x1xf32>
    %31 = vector.broadcast %30 : vector<16x1xf32> to vector<16x128xf32>
    %32 = arith.mulf %27, %31 : vector<16x128xf32>
    %c0_15 = arith.constant 0 : index
    %c0_16 = arith.constant 0 : index
    %33 = vector.load %arg6[%c0_15, %c0_16] : memref<16x128xf32, #tpu.memory_space<vmem>>, vector<16x128xf32>
    tpu.vector_store %arg6[%c0_15, %c0_16], %32 {strides = array<i32>} : memref<16x128xf32, #tpu.memory_space<vmem>>, vector<16x128xf32>,
    %c0_17 = arith.constant 0 : index
    %c0_18 = arith.constant 0 : index
    %34 = vector.load %arg7[%c0_17, %c0_18] : memref<16x128xf32, #tpu.memory_space<vmem>>, vector<16x128xf32>
    tpu.vector_store %arg7[%c0_17, %c0_18], %22 {strides = array<i32>} : memref<16x128xf32, #tpu.memory_space<vmem>>, vector<16x128xf32>,
    return
  }
  func.func @transform_0(%arg0: i32) -> (i32, i32) {
    %c0_i32 = arith.constant 0 : i32
    %c0_i32_0 = arith.constant 0 : i32
    return %arg0, %c0_i32 : i32, i32
  }
  func.func @transform_1(%arg0: i32) -> (i32, i32) {
    %c0_i32 = arith.constant 0 : i32
    %c0_i32_0 = arith.constant 0 : i32
    %c0_i32_1 = arith.constant 0 : i32
    return %c0_i32, %c0_i32_0 : i32, i32
  }
  func.func @transform_2(%arg0: i32) -> (i32, i32) {
    %c0_i32 = arith.constant 0 : i32
    %c0_i32_0 = arith.constant 0 : i32
    %c0_i32_1 = arith.constant 0 : i32
    return %c0_i32, %c0_i32_0 : i32, i32
  }
  func.func @transform_3(%arg0: i32) -> (i32, i32) {
    %c0_i32 = arith.constant 0 : i32
    %c0_i32_0 = arith.constant 0 : i32
    %c0_i32_1 = arith.constant 0 : i32
    return %c0_i32, %c0_i32_0 : i32, i32
  }
  func.func @transform_4(%arg0: i32) -> (i32, i32) {
    %c0_i32 = arith.constant 0 : i32
    %c0_i32_0 = arith.constant 0 : i32
    %c0_i32_1 = arith.constant 0 : i32
    return %c0_i32, %c0_i32_0 : i32, i32
  }
  func.func @transform_5(%arg0: i32) -> (i32, i32) {
    %c0_i32 = arith.constant 0 : i32
    %c0_i32_0 = arith.constant 0 : i32
    return %arg0, %c0_i32 : i32, i32
  }
  func.func @transform_6(%arg0: i32) -> (i32, i32) {
    %c0_i32 = arith.constant 0 : i32
    %c0_i32_0 = arith.constant 0 : i32
    return %arg0, %c0_i32 : i32, i32
  }
}

</mosaic_0001>

<llo_original>
// kernel: tpu_custom_call.1
$region0: #{tpu_custom_call.1}
  #allocation0 [shape = 'u32[]', space=smem, size = 0x4, offset = 0x4, fixed_abs, tag = 'smem constant byte address 0x4 - core index']
  #allocation1 [shape = 'u32[72,128]{1,0:T(1,128)}', space=vmem, size = 0x9000, scoped, tag = 'internal scratch']
  %s0 = inlined_call_operand.vmem [shape: bf16[16,720], index: 0, kind: input, shape index: {}]
  %s1 = inlined_call_operand.hbm [shape: bf16[720,128], index: 1, kind: input, shape index: {}]
  %s2 = inlined_call_operand.vmem [shape: bf16[128,32], index: 2, kind: input, shape index: {}]
  %s3 = inlined_call_operand.vmem [shape: bf16[32,128], index: 3, kind: input, shape index: {}]
  %s4 = inlined_call_operand.vmem [shape: f32[3,128], index: 4, kind: input, shape index: {}]
  %s5 = inlined_call_operand.hbm [shape: f32[16,128], index: 5, kind: output, shape index: {0}]
  %s6 = inlined_call_operand.hbm [shape: f32[16,128], index: 6, kind: output, shape index: {1}]
  %7 = xla_tuple %s5, %s6
  %s8 = sld [smem:[#allocation0]]
  $region42: #{tpu_custom_call.1} parent=0
    _
  %s10 = ssub.s32 1, %s8
  %s11 = scalar_select 0, %s10, %s8
  $region1: #{tpu_custom_call.1} parent=0
    #allocation2 [shape = 'u8[184320]{0}', space=vmem, size = 0x2d000, scoped, tag = 'input window, operand 1, single buffered']
    #allocation3 [shape = 's32[1]{0}', space=sflag, size = 0x4, scoped, tag = 'scoped memory for tpu_custom_call.1']
    #allocation4 [shape = 's32[1]{0}', space=sflag, size = 0x4, scoped, tag = 'scoped memory for tpu_custom_call.1']
    #allocation5 [shape = 'u8[8192]{0}', space=vmem, size = 0x2000, scoped, tag = 'output window, operand 0, single buffered']
    #allocation6 [shape = 'u8[8192]{0}', space=vmem, size = 0x2000, scoped, tag = 'output window, operand 1, single buffered']
    #allocation7 [shape = 's32[1]{0}', space=sflag, size = 0x4, scoped, tag = 'scoped memory for tpu_custom_call.1']
    %12 = vsyncpa [#allocation3], 0
    %13 = vsyncpa [#allocation4], 0
    %14 = vsyncpa [#allocation7], 0
    // Predicated region
    $region2: #{tpu_custom_call.1} parent=1 // pred_check
      _
    $region3: #{tpu_custom_call.1} parent=1 // pred_check_branch
      %16 = sbr.rel (0) target = $region5
    $region4: #{tpu_custom_call.1} parent=1 // pred_region
      _
    $region5: #{tpu_custom_call.1} parent=1 // pred_fallthru
      _
    // Predicated region
    $region6: #{tpu_custom_call.1} parent=1 // pred_check
      _
    $region7: #{tpu_custom_call.1} parent=1 // pred_check_branch
      %18 = sbr.rel (0) target = $region9
    $region8: #{tpu_custom_call.1} parent=1 // pred_region
      %20 = vsyncadd [#allocation3], 0
      %s21 = sshll.u32 %s1, 4
      %s22 = int_to_ptr.hbm [resolvable:$true] %s21
      %s23 = sshll.u32 [#allocation2], 4
      %s24 = int_to_ptr.vmem [resolvable:$true] %s23
      %29 = dma.hbm_to_vmem [thread:$0]  %s22, 5760, %s24, [#allocation3], 64, 64, 4
    $region9: #{tpu_custom_call.1} parent=1 // pred_fallthru
      _
    // Predicated region
    $region10: #{tpu_custom_call.1} parent=1 // pred_check
      _
    $region11: #{tpu_custom_call.1} parent=1 // pred_check_branch
      %31 = sbr.rel (0) target = $region13
    $region12: #{tpu_custom_call.1} parent=1 // pred_region
      _
    $region13: #{tpu_custom_call.1} parent=1 // pred_fallthru
      _
    // Predicated region
    $region14: #{tpu_custom_call.1} parent=1 // pred_check
      _
    $region15: #{tpu_custom_call.1} parent=1 // pred_check_branch
      %33 = sbr.rel (0) target = $region17
    $region16: #{tpu_custom_call.1} parent=1 // pred_region
      _
    $region17: #{tpu_custom_call.1} parent=1 // pred_fallthru
      _
    // Predicated region
    $region18: #{tpu_custom_call.1} parent=1 // pred_check
      _
    $region19: #{tpu_custom_call.1} parent=1 // pred_check_branch
      %35 = sbr.rel (0) target = $region21
    $region20: #{tpu_custom_call.1} parent=1 // pred_region
      _
    $region21: #{tpu_custom_call.1} parent=1 // pred_fallthru
      _
    // Predicated region
    $region22: #{tpu_custom_call.1} parent=1 // pred_check
      _
    $region23: #{tpu_custom_call.1} parent=1 // pred_check_branch
      %37 = sbr.rel (0) target = $region25
    $region24: #{tpu_custom_call.1} parent=1 // pred_region
      %39 = dma.done [#allocation3], 5760
    $region25: #{tpu_custom_call.1} parent=1 // pred_fallthru
      _
    %v41 = vld [vmem:[%s4] sm:$0x7]
    %v42 = vld [vmem:[%s0] sm:$0xff]
    %v43 = vld [vmem:[%s0 + $0x8] sm:$0xff]
    %v44 = vld [vmem:[%s0 + $0x10] sm:$0xff]
    %v45 = vld [vmem:[%s0 + $0x18] sm:$0xff]
    %v46 = vld [vmem:[%s0 + $0x20] sm:$0xff]
    %v47 = vld [vmem:[%s0 + $0x28] sm:$0xff]
    %v48 = vld [vmem:[#allocation2] sm:$0xf]
    %v49 = vld [vmem:[#allocation2 + $0x4] sm:$0xf]
    %v50 = vld [vmem:[#allocation2 + $0x8] sm:$0xf]
    %v51 = vld [vmem:[#allocation2 + $0xc] sm:$0xf]
    %v52 = vld [vmem:[#allocation2 + $0x10] sm:$0xf]
    %v53 = vld [vmem:[#allocation2 + $0x14] sm:$0xf]
    %v54 = vld [vmem:[#allocation2 + $0x18] sm:$0xf]
    %v55 = vld [vmem:[#allocation2 + $0x1c] sm:$0xf]
    %v56 = vld [vmem:[#allocation2 + $0x20] sm:$0xf]
    %v57 = vld [vmem:[#allocation2 + $0x24] sm:$0xf]
    %v58 = vld [vmem:[#allocation2 + $0x28] sm:$0xf]
    %v59 = vld [vmem:[#allocation2 + $0x2c] sm:$0xf]
    %v60 = vld [vmem:[#allocation2 + $0x30] sm:$0xf]
    %v61 = vld [vmem:[#allocation2 + $0x34] sm:$0xf]
    %v62 = vld [vmem:[#allocation2 + $0x38] sm:$0xf]
    %v63 = vld [vmem:[#allocation2 + $0x3c] sm:$0xf]
    %v64 = vld [vmem:[#allocation2 + $0x40] sm:$0xf]
    %v65 = vld [vmem:[#allocation2 + $0x44] sm:$0xf]
    %v66 = vld [vmem:[#allocation2 + $0x48] sm:$0xf]
    %v67 = vld [vmem:[#allocation2 + $0x4c] sm:$0xf]
    %v68 = vld [vmem:[#allocation2 + $0x50] sm:$0xf]
    %v69 = vld [vmem:[#allocation2 + $0x54] sm:$0xf]
    %v70 = vld [vmem:[#allocation2 + $0x58] sm:$0xf]
    %v71 = vld [vmem:[#allocation2 + $0x5c] sm:$0xf]
    %v72 = vld [vmem:[#allocation2 + $0x60] sm:$0xf]
    %v73 = vld [vmem:[#allocation2 + $0x64] sm:$0xf]
    %v74 = vld [vmem:[#allocation2 + $0x68] sm:$0xf]
    %v75 = vld [vmem:[#allocation2 + $0x6c] sm:$0xf]
    %v76 = vld [vmem:[#allocation2 + $0x70] sm:$0xf]
    %v77 = vld [vmem:[#allocation2 + $0x74] sm:$0xf]
    %v78 = vld [vmem:[#allocation2 + $0x78] sm:$0xf]
    %v79 = vld [vmem:[#allocation2 + $0x7c] sm:$0xf]
    %v80 = vld [vmem:[#allocation2 + $0x80] sm:$0xf]
    %v81 = vld [vmem:[#allocation2 + $0x84] sm:$0xf]
    %v82 = vld [vmem:[#allocation2 + $0x88] sm:$0xf]
    %v83 = vld [vmem:[#allocation2 + $0x8c] sm:$0xf]
    %v84 = vld [vmem:[#allocation2 + $0x90] sm:$0xf]
    %v85 = vld [vmem:[#allocation2 + $0x94] sm:$0xf]
    %v86 = vld [vmem:[#allocation2 + $0x98] sm:$0xf]
    %v87 = vld [vmem:[#allocation2 + $0x9c] sm:$0xf]
    %v88 = vld [vmem:[#allocation2 + $0xa0] sm:$0xf]
    %v89 = vld [vmem:[#allocation2 + $0xa4] sm:$0xf]
    %v90 = vld [vmem:[#allocation2 + $0xa8] sm:$0xf]
    %v91 = vld [vmem:[#allocation2 + $0xac] sm:$0xf]
    %v92 = vld [vmem:[#allocation2 + $0xb0] sm:$0xf]
    %v93 = vld [vmem:[#allocation2 + $0xb4] sm:$0xf]
    %v94 = vld [vmem:[#allocation2 + $0xb8] sm:$0xf]
    %v95 = vld [vmem:[#allocation2 + $0xbc] sm:$0xf]
    %v96 = vld [vmem:[#allocation2 + $0xc0] sm:$0xf]
    %v97 = vld [vmem:[#allocation2 + $0xc4] sm:$0xf]
    %v98 = vld [vmem:[#allocation2 + $0xc8] sm:$0xf]
    %v99 = vld [vmem:[#allocation2 + $0xcc] sm:$0xf]
    %v100 = vld [vmem:[#allocation2 + $0xd0] sm:$0xf]
    %v101 = vld [vmem:[#allocation2 + $0xd4] sm:$0xf]
    %v102 = vld [vmem:[#allocation2 + $0xd8] sm:$0xf]
    %v103 = vld [vmem:[#allocation2 + $0xdc] sm:$0xf]
    %v104 = vld [vmem:[#allocation2 + $0xe0] sm:$0xf]
    %v105 = vld [vmem:[#allocation2 + $0xe4] sm:$0xf]
    %v106 = vld [vmem:[#allocation2 + $0xe8] sm:$0xf]
    %v107 = vld [vmem:[#allocation2 + $0xec] sm:$0xf]
    %v108 = vld [vmem:[#allocation2 + $0xf0] sm:$0xf]
    %v109 = vld [vmem:[#allocation2 + $0xf4] sm:$0xf]
    %v110 = vld [vmem:[#allocation2 + $0xf8] sm:$0xf]
    %v111 = vld [vmem:[#allocation2 + $0xfc] sm:$0xf]
    %v112 = vld [vmem:[#allocation2 + $0x100] sm:$0xf]
    %v113 = vld [vmem:[#allocation2 + $0x104] sm:$0xf]
    %v114 = vld [vmem:[#allocation2 + $0x108] sm:$0xf]
    %v115 = vld [vmem:[#allocation2 + $0x10c] sm:$0xf]
    %v116 = vld [vmem:[#allocation2 + $0x110] sm:$0xf]
    %v117 = vld [vmem:[#allocation2 + $0x114] sm:$0xf]
    %v118 = vld [vmem:[#allocation2 + $0x118] sm:$0xf]
    %v119 = vld [vmem:[#allocation2 + $0x11c] sm:$0xf]
    %v120 = vld [vmem:[#allocation2 + $0x120] sm:$0xf]
    %v121 = vld [vmem:[#allocation2 + $0x124] sm:$0xf]
    %v122 = vld [vmem:[#allocation2 + $0x128] sm:$0xf]
    %v123 = vld [vmem:[#allocation2 + $0x12c] sm:$0xf]
    %v124 = vld [vmem:[#allocation2 + $0x130] sm:$0xf]
    %v125 = vld [vmem:[#allocation2 + $0x134] sm:$0xf]
    %v126 = vld [vmem:[#allocation2 + $0x138] sm:$0xf]
    %v127 = vld [vmem:[#allocation2 + $0x13c] sm:$0xf]
    %v128 = vld [vmem:[#allocation2 + $0x140] sm:$0xf]
    %v129 = vld [vmem:[#allocation2 + $0x144] sm:$0xf]
    %v130 = vld [vmem:[#allocation2 + $0x148] sm:$0xf]
    %v131 = vld [vmem:[#allocation2 + $0x14c] sm:$0xf]
    %v132 = vld [vmem:[#allocation2 + $0x150] sm:$0xf]
    %v133 = vld [vmem:[#allocation2 + $0x154] sm:$0xf]
    %v134 = vld [vmem:[#allocation2 + $0x158] sm:$0xf]
    %v135 = vld [vmem:[#allocation2 + $0x15c] sm:$0xf]
    %v136 = vld [vmem:[#allocation2 + $0x160] sm:$0xf]
    %v137 = vld [vmem:[#allocation2 + $0x164] sm:$0xf]
    %v138 = vperm.slane %v41, 0
    %v145 = vunpack.c.l.b16 %v42
    %v146 = vunpack.c.h.b16 %v42
    %v147 = vunpack.c.l.b16 %v43
    %v148 = vunpack.c.h.b16 %v43
    %v149 = vunpack.c.l.b16 %v44
    %v150 = vunpack.c.h.b16 %v44
    %v151 = vunpack.c.l.b16 %v45
    %v152 = vunpack.c.h.b16 %v45
    %v153 = vunpack.c.l.b16 %v46
    %v154 = vunpack.c.h.b16 %v46
    %v155 = vunpack.c.l.b16 %v47
    %v156 = vunpack.c.h.b16 %v47
    %v157 = vpack.c.b16 %v151, %v145
    %v158 = vpack.c.b16 %v152, %v146
    %v159 = vpack.c.b16 %v153, %v147
    %v160 = vpack.c.b16 %v154, %v148
    %v161 = vpack.c.b16 %v155, %v149
    %v162 = vpack.c.b16 %v156, %v150
    %v258 = vunpack.c.l.b16 %v48
    %v259 = vunpack.c.l.b16 %v49
    %v260 = vunpack.c.l.b16 %v50
    %v261 = vunpack.c.l.b16 %v51
    %v262 = vunpack.c.l.b16 %v52
    %v263 = vunpack.c.l.b16 %v53
    %v264 = vunpack.c.l.b16 %v54
    %v265 = vunpack.c.l.b16 %v55
    %v266 = vunpack.c.l.b16 %v56
    %v267 = vunpack.c.l.b16 %v57
    %v268 = vunpack.c.l.b16 %v58
    %v269 = vunpack.c.l.b16 %v59
    %v270 = vunpack.c.l.b16 %v60
    %v271 = vunpack.c.l.b16 %v61
    %v272 = vunpack.c.l.b16 %v62
    %v273 = vunpack.c.l.b16 %v63
    %v274 = vunpack.c.l.b16 %v64
    %v275 = vunpack.c.l.b16 %v65
    %v276 = vunpack.c.l.b16 %v66
    %v277 = vunpack.c.l.b16 %v67
    %v278 = vunpack.c.l.b16 %v68
    %v279 = vunpack.c.l.b16 %v69
    %v280 = vunpack.c.l.b16 %v70
    %v281 = vunpack.c.l.b16 %v71
    %v282 = vunpack.c.l.b16 %v72
    %v283 = vunpack.c.l.b16 %v73
    %v284 = vunpack.c.l.b16 %v74
    %v285 = vunpack.c.l.b16 %v75
    %v286 = vunpack.c.l.b16 %v76
    %v287 = vunpack.c.l.b16 %v77
    %v288 = vunpack.c.l.b16 %v78
    %v289 = vunpack.c.l.b16 %v79
    %v290 = vunpack.c.l.b16 %v80
    %v291 = vunpack.c.l.b16 %v81
    %v292 = vunpack.c.l.b16 %v82
    %v293 = vunpack.c.l.b16 %v83
    %v294 = vunpack.c.l.b16 %v84
    %v295 = vunpack.c.l.b16 %v85
    %v296 = vunpack.c.l.b16 %v86
    %v297 = vunpack.c.l.b16 %v87
    %v298 = vunpack.c.l.b16 %v88
    %v299 = vunpack.c.l.b16 %v89
    %v300 = vunpack.c.l.b16 %v90
    %v301 = vunpack.c.l.b16 %v91
    %v302 = vunpack.c.l.b16 %v92
    %v303 = vunpack.c.l.b16 %v93
    %v304 = vunpack.c.l.b16 %v94
    %v305 = vunpack.c.l.b16 %v95
    %v306 = vunpack.c.l.b16 %v96
    %v307 = vunpack.c.l.b16 %v97
    %v308 = vunpack.c.l.b16 %v98
    %v309 = vunpack.c.l.b16 %v99
    %v310 = vunpack.c.l.b16 %v100
    %v311 = vunpack.c.l.b16 %v101
    %v312 = vunpack.c.l.b16 %v102
    %v313 = vunpack.c.l.b16 %v103
    %v314 = vunpack.c.l.b16 %v104
    %v315 = vunpack.c.l.b16 %v105
    %v316 = vunpack.c.l.b16 %v106
    %v317 = vunpack.c.l.b16 %v107
    %v318 = vunpack.c.l.b16 %v108
    %v319 = vunpack.c.l.b16 %v109
    %v320 = vunpack.c.l.b16 %v110
    %v321 = vunpack.c.l.b16 %v111
    %v322 = vunpack.c.l.b16 %v112
    %v323 = vunpack.c.l.b16 %v113
    %v324 = vunpack.c.l.b16 %v114
    %v325 = vunpack.c.l.b16 %v115
    %v326 = vunpack.c.l.b16 %v116
    %v327 = vunpack.c.l.b16 %v117
    %v328 = vunpack.c.l.b16 %v118
    %v329 = vunpack.c.l.b16 %v119
    %v330 = vunpack.c.l.b16 %v120
    %v331 = vunpack.c.l.b16 %v121
    %v332 = vunpack.c.l.b16 %v122
    %v333 = vunpack.c.l.b16 %v123
    %v334 = vunpack.c.l.b16 %v124
    %v335 = vunpack.c.l.b16 %v125
    %v336 = vunpack.c.l.b16 %v126
    %v337 = vunpack.c.l.b16 %v127
    %v338 = vunpack.c.l.b16 %v128
    %v339 = vunpack.c.l.b16 %v129
    %v340 = vunpack.c.l.b16 %v130
    %v341 = vunpack.c.l.b16 %v131
    %v342 = vunpack.c.l.b16 %v132
    %v343 = vunpack.c.l.b16 %v133
    %v344 = vunpack.c.l.b16 %v134
    %v345 = vunpack.c.l.b16 %v135
    %v346 = vunpack.c.l.b16 %v136
    %v347 = vunpack.c.l.b16 %v137
    %v348 = vpack.c.b16 %v259, %v258
    %v349 = vpack.c.b16 %v261, %v260
    %v350 = vpack.c.b16 %v263, %v262
    %v351 = vpack.c.b16 %v265, %v264
    %v352 = vpack.c.b16 %v267, %v266
    %v353 = vpack.c.b16 %v269, %v268
    %v354 = vpack.c.b16 %v271, %v270
    %v355 = vpack.c.b16 %v273, %v272
    %v356 = vpack.c.b16 %v275, %v274
    %v357 = vpack.c.b16 %v277, %v276
    %v358 = vpack.c.b16 %v279, %v278
    %v359 = vpack.c.b16 %v281, %v280
    %v360 = vpack.c.b16 %v283, %v282
    %v361 = vpack.c.b16 %v285, %v284
    %v362 = vpack.c.b16 %v287, %v286
    %v363 = vpack.c.b16 %v289, %v288
    %v364 = vpack.c.b16 %v291, %v290
    %v365 = vpack.c.b16 %v293, %v292
    %v366 = vpack.c.b16 %v295, %v294
    %v367 = vpack.c.b16 %v297, %v296
    %v368 = vpack.c.b16 %v299, %v298
    %v369 = vpack.c.b16 %v301, %v300
    %v370 = vpack.c.b16 %v303, %v302
    %v371 = vpack.c.b16 %v305, %v304
    %v372 = vpack.c.b16 %v307, %v306
    %v373 = vpack.c.b16 %v309, %v308
    %v374 = vpack.c.b16 %v311, %v310
    %v375 = vpack.c.b16 %v313, %v312
    %v376 = vpack.c.b16 %v315, %v314
    %v377 = vpack.c.b16 %v317, %v316
    %v378 = vpack.c.b16 %v319, %v318
    %v379 = vpack.c.b16 %v321, %v320
    %v380 = vpack.c.b16 %v323, %v322
    %v381 = vpack.c.b16 %v325, %v324
    %v382 = vpack.c.b16 %v327, %v326
    %v383 = vpack.c.b16 %v329, %v328
    %v384 = vpack.c.b16 %v331, %v330
    %v385 = vpack.c.b16 %v333, %v332
    %v386 = vpack.c.b16 %v335, %v334
    %v387 = vpack.c.b16 %v337, %v336
    %v388 = vpack.c.b16 %v339, %v338
    %v389 = vpack.c.b16 %v341, %v340
    %v390 = vpack.c.b16 %v343, %v342
    %v391 = vpack.c.b16 %v345, %v344
    %v392 = vpack.c.b16 %v347, %v346
    %vm438 = vcmask 654336
    %v440 = vsel %vm438, %v162, 0
    %442 = vmatpush.bf16.msra.mxu0 %v355
    %443 = vmatpush.bf16.msra.mxu0 %v354
    %444 = vmatpush.bf16.msra.mxu0 %v353
    %445 = vmatpush.bf16.msra.mxu0 %v352
    %446 = vmatpush.bf16.msra.mxu0 %v351
    %447 = vmatpush.bf16.msra.mxu0 %v350
    %448 = vmatpush.bf16.msra.mxu0 %v349
    %449 = vmatpush.bf16.msra.mxu0 %v348
    %450 = vmatmul.bf16.gmra.mxu0 %v157
    %v451 = vpop.f32.mrf.mxu0
    %v452 = vadd.f32 %v138, %v451
    %v453 = vpop.f32.mrf.mxu0
    %v454 = vadd.f32 %v138, %v453
    %455 = vdwg.mxu0
    %456 = vmatpush.bf16.msra.mxu0 %v363
    %457 = vmatpush.bf16.msra.mxu0 %v362
    %458 = vmatpush.bf16.msra.mxu0 %v361
    %459 = vmatpush.bf16.msra.mxu0 %v360
    %460 = vmatpush.bf16.msra.mxu0 %v359
    %461 = vmatpush.bf16.msra.mxu0 %v358
    %462 = vmatpush.bf16.msra.mxu0 %v357
    %463 = vmatpush.bf16.msra.mxu0 %v356
    %464 = vmatmul.bf16.gmra.mxu0 %v158
    %v465 = vpop.f32.mrf.mxu0
    %v466 = vadd.f32 %v452, %v465
    %v467 = vpop.f32.mrf.mxu0
    %v468 = vadd.f32 %v454, %v467
    %469 = vdwg.mxu0
    %470 = vmatpush.bf16.msra.mxu0 %v371
    %471 = vmatpush.bf16.msra.mxu0 %v370
    %472 = vmatpush.bf16.msra.mxu0 %v369
    %473 = vmatpush.bf16.msra.mxu0 %v368
    %474 = vmatpush.bf16.msra.mxu0 %v367
    %475 = vmatpush.bf16.msra.mxu0 %v366
    %476 = vmatpush.bf16.msra.mxu0 %v365
    %477 = vmatpush.bf16.msra.mxu0 %v364
    %478 = vmatmul.bf16.gmra.mxu0 %v159
    %v479 = vpop.f32.mrf.mxu0
    %v480 = vadd.f32 %v466, %v479
    %v481 = vpop.f32.mrf.mxu0
    %v482 = vadd.f32 %v468, %v481
    %483 = vdwg.mxu0
    %484 = vmatpush.bf16.msra.mxu0 %v379
    %485 = vmatpush.bf16.msra.mxu0 %v378
    %486 = vmatpush.bf16.msra.mxu0 %v377
    %487 = vmatpush.bf16.msra.mxu0 %v376
    %488 = vmatpush.bf16.msra.mxu0 %v375
    %489 = vmatpush.bf16.msra.mxu0 %v374
    %490 = vmatpush.bf16.msra.mxu0 %v373
    %491 = vmatpush.bf16.msra.mxu0 %v372
    %492 = vmatmul.bf16.gmra.mxu0 %v160
    %v493 = vpop.f32.mrf.mxu0
    %v494 = vadd.f32 %v480, %v493
    %v495 = vpop.f32.mrf.mxu0
    %v496 = vadd.f32 %v482, %v495
    %497 = vdwg.mxu0
    %498 = vmatpush.bf16.msra.mxu0 %v387
    %499 = vmatpush.bf16.msra.mxu0 %v386
    %500 = vmatpush.bf16.msra.mxu0 %v385
    %501 = vmatpush.bf16.msra.mxu0 %v384
    %502 = vmatpush.bf16.msra.mxu0 %v383
    %503 = vmatpush.bf16.msra.mxu0 %v382
    %504 = vmatpush.bf16.msra.mxu0 %v381
    %505 = vmatpush.bf16.msra.mxu0 %v380
    %506 = vmatmul.bf16.gmra.mxu0 %v161
    %v507 = vpop.f32.mrf.mxu0
    %v508 = vadd.f32 %v494, %v507
    %v509 = vpop.f32.mrf.mxu0
    %v510 = vadd.f32 %v496, %v509
    %511 = vdwg.mxu0
    %512 = vmatpush.bf16.msra.mxu0 0
    %513 = vmatpush.bf16.msra.mxu0 0
    %514 = vmatpush.bf16.msra.mxu0 0
    %515 = vmatpush.bf16.msra.mxu0 %v392
    %516 = vmatpush.bf16.msra.mxu0 %v391
    %517 = vmatpush.bf16.msra.mxu0 %v390
    %518 = vmatpush.bf16.msra.mxu0 %v389
    %519 = vmatpush.bf16.msra.mxu0 %v388
    %520 = vmatmul.bf16.gmra.mxu0 %v440
    %v521 = vpop.f32.mrf.mxu0
    %v522 = vadd.f32 %v508, %v521
    %v523 = vpop.f32.mrf.mxu0
    %v524 = vadd.f32 %v510, %v523
    %525 = vdwg.mxu0
    %v526 = vmax.f32 %v522, 0.0
    %v527 = vmax.f32 %v524, 0.0
    %v528 = vpack.c.bf16 %v527, %v526
    %v529 = vld [vmem:[%s2] sm:$0xf]
    %v530 = vld [vmem:[%s2 + $0x4] sm:$0xf]
    %v531 = vld [vmem:[%s2 + $0x8] sm:$0xf]
    %v532 = vld [vmem:[%s2 + $0xc] sm:$0xf]
    %v533 = vld [vmem:[%s2 + $0x10] sm:$0xf]
    %v534 = vld [vmem:[%s2 + $0x14] sm:$0xf]
    %v535 = vld [vmem:[%s2 + $0x18] sm:$0xf]
    %v536 = vld [vmem:[%s2 + $0x1c] sm:$0xf]
    %v537 = vld [vmem:[%s2 + $0x20] sm:$0xf]
    %v538 = vld [vmem:[%s2 + $0x24] sm:$0xf]
    %v539 = vld [vmem:[%s2 + $0x28] sm:$0xf]
    %v540 = vld [vmem:[%s2 + $0x2c] sm:$0xf]
    %v541 = vld [vmem:[%s2 + $0x30] sm:$0xf]
    %v542 = vld [vmem:[%s2 + $0x34] sm:$0xf]
    %v543 = vld [vmem:[%s2 + $0x38] sm:$0xf]
    %v544 = vld [vmem:[%s2 + $0x3c] sm:$0xf]
    %v545 = vperm.slane %v41, 1
    %v562 = vunpack.c.l.b16 %v529
    %v563 = vunpack.c.l.b16 %v530
    %v564 = vunpack.c.l.b16 %v531
    %v565 = vunpack.c.l.b16 %v532
    %v566 = vunpack.c.l.b16 %v533
    %v567 = vunpack.c.l.b16 %v534
    %v568 = vunpack.c.l.b16 %v535
    %v569 = vunpack.c.l.b16 %v536
    %v570 = vunpack.c.l.b16 %v537
    %v571 = vunpack.c.l.b16 %v538
    %v572 = vunpack.c.l.b16 %v539
    %v573 = vunpack.c.l.b16 %v540
    %v574 = vunpack.c.l.b16 %v541
    %v575 = vunpack.c.l.b16 %v542
    %v576 = vunpack.c.l.b16 %v543
    %v577 = vunpack.c.l.b16 %v544
    %v578 = vpack.c.b16 %v563, %v562
    %v579 = vpack.c.b16 %v565, %v564
    %v580 = vpack.c.b16 %v567, %v566
    %v581 = vpack.c.b16 %v569, %v568
    %v582 = vpack.c.b16 %v571, %v570
    %v583 = vpack.c.b16 %v573, %v572
    %v584 = vpack.c.b16 %v575, %v574
    %v585 = vpack.c.b16 %v577, %v576
    %594 = vmatpush.bf16.msra.mxu0 %v585
    %595 = vmatpush.bf16.msra.mxu0 %v584
    %596 = vmatpush.bf16.msra.mxu0 %v583
    %597 = vmatpush.bf16.msra.mxu0 %v582
    %598 = vmatpush.bf16.msra.mxu0 %v581
    %599 = vmatpush.bf16.msra.mxu0 %v580
    %600 = vmatpush.bf16.msra.mxu0 %v579
    %601 = vmatpush.bf16.msra.mxu0 %v578
    %602 = vmatmul.bf16.gmra.mxu0 %v528
    %v603 = vpop.f32.mrf.mxu0
    %v604 = vadd.f32 %v545, %v603
    %v605 = vpop.f32.mrf.mxu0
    %v606 = vadd.f32 %v545, %v605
    %607 = vdwg.mxu0
    %v608 = vmax.f32 %v604, 0.0
    %v609 = vmax.f32 %v606, 0.0
    %v610 = vpack.c.bf16 %v609, %v608
    %v611 = vld [vmem:[%s3] sm:$0xf]
    %v612 = vld [vmem:[%s3 + $0x4] sm:$0xf]
    %v613 = vld [vmem:[%s3 + $0x8] sm:$0xf]
    %v614 = vld [vmem:[%s3 + $0xc] sm:$0xf]
    %v615 = vperm.slane %v41, 2
    %v620 = vunpack.c.l.b16 %v611
    %v621 = vunpack.c.l.b16 %v612
    %v622 = vunpack.c.l.b16 %v613
    %v623 = vunpack.c.l.b16 %v614
    %v624 = vpack.c.b16 %v621, %v620
    %v625 = vpack.c.b16 %v623, %v622
    %vm628 = vcmask 261120
    %v630 = vsel %vm628, %v610, 0
    %632 = vmatpush.bf16.msra.mxu0 0
    %633 = vmatpush.bf16.msra.mxu0 0
    %634 = vmatpush.bf16.msra.mxu0 0
    %635 = vmatpush.bf16.msra.mxu0 0
    %636 = vmatpush.bf16.msra.mxu0 0
    %637 = vmatpush.bf16.msra.mxu0 0
    %638 = vmatpush.bf16.msra.mxu0 %v625
    %639 = vmatpush.bf16.msra.mxu0 %v624
    %640 = vmatmul.bf16.gmra.mxu0 %v630
    %v641 = vpop.f32.mrf.mxu0
    %v642 = vadd.f32 %v615, %v641
    %v643 = vpop.f32.mrf.mxu0
    %v644 = vadd.f32 %v615, %v643
    %645 = vdwg.mxu0
    %646 = vmax.xlane.f32.xlu0 %v642
    %v647 = vpop.xlane.xlu0 %646
    %648 = vmax.xlane.f32.xlu0 %v644
    %v649 = vpop.xlane.xlu0 %648
    %v650 = vsub.f32 %v642, %v647
    %v651 = vsub.f32 %v644, %v649
    %v652 = vmul.f32 %v650, 1.442695
    %v653 = vpow.pop %v652
    %v654 = vmul.f32 %v651, 1.442695
    %v655 = vpow.pop %v654
    %656 = vadd.xlane.f32.xlu0 %v653
    %v657 = vpop.xlane.xlu0 %656
    %658 = vadd.xlane.f32.xlu0 %v655
    %v659 = vpop.xlane.xlu0 %658
    %v660 = vrcp.pop %v657
    %v661 = vrcp.pop %v659
    %v662 = vmul.f32 %v653, %v660
    %v663 = vmul.f32 %v655, %v661
    %664 = vst [vmem:[#allocation5] sm:$0xff] %v662
    %665 = vst [vmem:[#allocation5 + $0x8] sm:$0xff] %v663
    %666 = vst [vmem:[#allocation6] sm:$0xff] %v642
    %667 = vst [vmem:[#allocation6 + $0x8] sm:$0xff] %v644
    // Predicated region
    $region26: #{tpu_custom_call.1} parent=1 // pred_check
      _
    $region27: #{tpu_custom_call.1} parent=1 // pred_check_branch
      %669 = sbr.rel (0) target = $region29
    $region28: #{tpu_custom_call.1} parent=1 // pred_region
      %671 = vsyncadd [#allocation4], 0
      %s672 = sshll.u32 [#allocation5], 4
      %s673 = int_to_ptr.vmem [resolvable:$true] %s672
      %s674 = sshll.u32 %s5, 4
      %s675 = int_to_ptr.hbm [resolvable:$true] %s674
      %680 = dma.vmem_to_hbm [thread:$0]  %s673, 256, %s675, [#allocation4], 128, 128, 8
    $region29: #{tpu_custom_call.1} parent=1 // pred_fallthru
      _
    // Predicated region
    $region30: #{tpu_custom_call.1} parent=1 // pred_check
      _
    $region31: #{tpu_custom_call.1} parent=1 // pred_check_branch
      %682 = sbr.rel (0) target = $region33
    $region32: #{tpu_custom_call.1} parent=1 // pred_region
      %684 = vsyncadd [#allocation7], 0
      %s685 = sshll.u32 [#allocation6], 4
      %s686 = int_to_ptr.vmem [resolvable:$true] %s685
      %s687 = sshll.u32 %s6, 4
      %s688 = int_to_ptr.hbm [resolvable:$true] %s687
      %693 = dma.vmem_to_hbm [thread:$0]  %s686, 256, %s688, [#allocation7], 128, 128, 8
    $region33: #{tpu_custom_call.1} parent=1 // pred_fallthru
      _
    // Predicated region
    $region34: #{tpu_custom_call.1} parent=1 // pred_check
      _
    $region35: #{tpu_custom_call.1} parent=1 // pred_check_branch
      %695 = sbr.rel (0) target = $region37
    $region36: #{tpu_custom_call.1} parent=1 // pred_region
      %697 = dma.done [#allocation4], 256
    $region37: #{tpu_custom_call.1} parent=1 // pred_fallthru
      _
    // Predicated region
    $region38: #{tpu_custom_call.1} parent=1 // pred_check
      _
    $region39: #{tpu_custom_call.1} parent=1 // pred_check_branch
      %699 = sbr.rel (0) target = $region41
    $region40: #{tpu_custom_call.1} parent=1 // pred_region
      %701 = dma.done [#allocation7], 256
    $region41: #{tpu_custom_call.1} parent=1 // pred_fallthru
      _
    %702 = vsyncpa [#allocation3], 1
    %703 = vsyncpa [#allocation4], 1
    %704 = vsyncpa [#allocation7], 1

</llo_original>
